<compile_context>
chip_gen: v7x
topology: tpu7x:2x2x1
jax: 0.10.0
libtpu: 0.0.40
codegen_flags: <defaults>
</compile_context>

<pallas_src>
import functools

import jax
import jax.numpy as jnp
from jax.experimental import pallas as pl
from jax.experimental.pallas import tpu as pltpu


def _round_up(n, m):
    return ((n + m - 1) // m) * m


def reward_model_kernel(x_ref, w1_ref, w2_ref, out_ref, *, ones_col):
    # fc1 (+ folded b1): bf16 MXU matmul, f32 accumulation.
    h = jnp.dot(x_ref[...], w1_ref[...], preferred_element_type=jnp.float32)
    h = jnp.maximum(h, 0.0)  # ReLU in f32 (VPU)
    # Inject the ones column that multiplies the b2 row folded into w2_aug.
    lane = jax.lax.broadcasted_iota(jnp.int32, h.shape, 1)
    h = jnp.where(lane == ones_col, 1.0, h)
    # fc2 (+ folded b2): bf16 MXU matmul, f32 accumulation.
    y = jnp.dot(h.astype(jnp.bfloat16), w2_ref[...],
                preferred_element_type=jnp.float32)
    out_ref[...] = y.astype(out_ref.dtype)


def prepare_reward_model_params(w1, b1, w2, b2):
    """One-time prep: fold biases, pad all dims to 128 multiples, cast to bf16.

    Layout: y = relu(x @ w1 + b1) @ w2 + b2 (weights already transposed vs.
    PyTorch's nn.Linear storage).
    """
    I, H = w1.shape
    O = w2.shape[1]
    I_pad = _round_up(I + 1, 128)   # +1: ones column for the b1 fold
    H_pad = _round_up(H + 1, 128)   # +1: ones column for the b2 fold
    O_pad = _round_up(O, 128)       # lane-dense output stores

    w1_aug = jnp.zeros((I_pad, H_pad), jnp.float32)
    w1_aug = w1_aug.at[:I, :H].set(w1).at[I, :H].set(b1)
    w2_aug = jnp.zeros((H_pad, O_pad), jnp.float32)
    w2_aug = w2_aug.at[:H, :O].set(w2).at[H, :O].set(b2)

    return dict(
        w1_aug=w1_aug.astype(jnp.bfloat16),
        w2_aug=w2_aug.astype(jnp.bfloat16),
        input_size=I, hidden_size=H, output_size=O,
        input_pad=I_pad, hidden_pad=H_pad, output_pad=O_pad,
    )


# Above this batch size, tile the batch: gives v7x's second TensorCore a
# parallel grid axis and keeps per-block VMEM well under its 64 MiB.
_BATCH_TILE = 512


def reward_model_forward(x, params):
    """x: [B, input_size] float32 -> [B, output_size] float32."""
    B = x.shape[0]
    I, H, O = params["input_size"], params["hidden_size"], params["output_size"]
    I_pad, H_pad, O_pad = params["input_pad"], params["hidden_pad"], params["output_pad"]
    w1_aug, w2_aug = params["w1_aug"], params["w2_aug"]

    kernel = functools.partial(reward_model_kernel, ones_col=H)

    use_grid = B > _BATCH_TILE
    B_pad = _round_up(B, _BATCH_TILE if use_grid else 8)

    # Per-call activation prep only: pad lanes to I_pad, append the ones
    # column (b1 fold), pad batch, cast to bf16.
    x_aug = jnp.zeros((B_pad, I_pad), jnp.float32)
    x_aug = x_aug.at[:B, :I].set(x).at[:B, I].set(1.0)
    x_aug = x_aug.astype(jnp.bfloat16)

    cost = pl.CostEstimate(
        flops=2 * B_pad * (I_pad * H_pad + H_pad * O_pad),
        transcendentals=0,
        bytes_accessed=2 * (B_pad * I_pad + I_pad * H_pad + H_pad * O_pad)
        + 4 * B_pad * O_pad,
    )

    if use_grid:
        out_pad = pl.pallas_call(
            kernel,
            out_shape=jax.ShapeDtypeStruct((B_pad, O_pad), jnp.float32),
            grid=(B_pad // _BATCH_TILE,),
            in_specs=[
                pl.BlockSpec((_BATCH_TILE, I_pad), lambda i: (i, 0)),
                pl.BlockSpec((I_pad, H_pad), lambda i: (0, 0)),   # VMEM-resident
                pl.BlockSpec((H_pad, O_pad), lambda i: (0, 0)),   # VMEM-resident
            ],
            out_specs=pl.BlockSpec((_BATCH_TILE, O_pad), lambda i: (i, 0)),
            compiler_params=pltpu.CompilerParams(
                dimension_semantics=("parallel",)),
            cost_estimate=cost,
        )(x_aug, w1_aug, w2_aug)
    else:
        # Single-shot: no grid, every operand is one full VMEM block.
        vmem = lambda: pl.BlockSpec(memory_space=pltpu.MemorySpace.VMEM)
        out_pad = pl.pallas_call(
            kernel,
            out_shape=jax.ShapeDtypeStruct((B_pad, O_pad), jnp.float32),
            in_specs=[vmem(), vmem(), vmem()],
            out_specs=vmem(),
            cost_estimate=cost,
        )(x_aug, w1_aug, w2_aug)

    return out_pad[:B, :O]


if __name__ == "__main__":
    # Module hyperparameters (small, consistent with the MLP forward).
    input_size, hidden_size, output_size = 32, 64, 8
    batch = 8

    key = jax.random.PRNGKey(0)
    kx, kw1, kb1, kw2, kb2 = jax.random.split(key, 5)

    x = jax.random.normal(kx, (batch, input_size), dtype=jnp.float32)
    # Deterministic synthetic parameters (PyTorch-style scale ~ 1/sqrt(fan_in)).
    w1 = jax.random.uniform(kw1, (input_size, hidden_size), jnp.float32,
                            -1.0, 1.0) / jnp.sqrt(input_size)
    b1 = jax.random.uniform(kb1, (hidden_size,), jnp.float32,
                            -1.0, 1.0) / jnp.sqrt(input_size)
    w2 = jax.random.uniform(kw2, (hidden_size, output_size), jnp.float32,
                            -1.0, 1.0) / jnp.sqrt(hidden_size)
    b2 = jax.random.uniform(kb2, (output_size,), jnp.float32,
                            -1.0, 1.0) / jnp.sqrt(hidden_size)

    params = prepare_reward_model_params(w1, b1, w2, b2)   # one-time prep
    out = reward_model_forward(x, params)
    out = jax.block_until_ready(out)
    assert out.shape == (batch, output_size)

    # Tight check against a reference using the same bf16 quantization of
    # inputs/weights that the kernel feeds the MXU (f32 accumulation).
    def q(a):
        return a.astype(jnp.bfloat16).astype(jnp.float32)
    h_ref = jnp.maximum(q(x) @ q(w1) + q(b1), 0.0)
    ref_q = q(h_ref) @ q(w2) + q(b2)
    assert jnp.allclose(out, ref_q, atol=2e-3, rtol=2e-3)

    # Looser check against the pure-f32 module semantics (bf16 MXU inputs).
    ref_f32 = jnp.maximum(x @ w1 + b1, 0.0) @ w2 + b2
    assert jnp.allclose(out, ref_f32, atol=5e-2, rtol=5e-2)

    print("KERNEL_OK")
</pallas_src>

<mosaic_0001>
module attributes {stable_mosaic.version = 11 : i64} {
  func.func @reward_model_kernel(%arg0: memref<8x128xbf16, #tpu.memory_space<vmem>>, %arg1: memref<128x128xbf16, #tpu.memory_space<vmem>>, %arg2: memref<128x128xbf16, #tpu.memory_space<vmem>>, %arg3: memref<8x128xf32, #tpu.memory_space<vmem>>) attributes {dimension_semantics = [], scalar_prefetch = 0 : i64, scratch_operands = 0 : i64, tpu.core_type = #tpu.core_type<tc>} {
    %c0 = arith.constant 0 : index
    %c0_0 = arith.constant 0 : index
    %0 = vector.load %arg0[%c0, %c0_0] : memref<8x128xbf16, #tpu.memory_space<vmem>>, vector<8x128xbf16>
    %c0_1 = arith.constant 0 : index
    %c0_2 = arith.constant 0 : index
    %1 = vector.load %arg1[%c0_1, %c0_2] : memref<128x128xbf16, #tpu.memory_space<vmem>>, vector<128x128xbf16>
    %cst = arith.constant dense<0.000000e+00> : vector<8x128xf32>
    %2 = tpu.matmul %0, %1, %cst {dimension_numbers = #tpu.dot_dimension_numbers<[1], [0], [0], [1], [0, 0, 1, 1], [], []>} : vector<8x128xbf16>, vector<128x128xbf16>, vector<8x128xf32> -> vector<8x128xf32>
    %cst_3 = arith.constant 0.000000e+00 : f32
    %3 = vector.broadcast %cst_3 : f32 to vector<8x128xf32>
    %4 = arith.maximumf %2, %3 : vector<8x128xf32>
    %5 = tpu.iota {dimensions = array<i32: 1>} : vector<8x128xi32>
    %c64_i32 = arith.constant 64 : i32
    %6 = vector.broadcast %c64_i32 : i32 to vector<8x128xi32>
    %7 = arith.cmpi eq, %5, %6 : vector<8x128xi32>
    %cst_4 = arith.constant 1.000000e+00 : f32
    %8 = vector.broadcast %cst_4 : f32 to vector<8x128xf32>
    %9 = arith.select %7, %8, %4 : vector<8x128xi1>, vector<8x128xf32>
    %10 = arith.truncf %9 : vector<8x128xf32> to vector<8x128xbf16>
    %c0_5 = arith.constant 0 : index
    %c0_6 = arith.constant 0 : index
    %11 = vector.load %arg2[%c0_5, %c0_6] : memref<128x128xbf16, #tpu.memory_space<vmem>>, vector<128x128xbf16>
    %cst_7 = arith.constant dense<0.000000e+00> : vector<8x128xf32>
    %12 = tpu.matmul %10, %11, %cst_7 {dimension_numbers = #tpu.dot_dimension_numbers<[1], [0], [0], [1], [0, 0, 1, 1], [], []>} : vector<8x128xbf16>, vector<128x128xbf16>, vector<8x128xf32> -> vector<8x128xf32>
    %c0_8 = arith.constant 0 : index
    %c0_9 = arith.constant 0 : index
    %13 = vector.load %arg3[%c0_8, %c0_9] : memref<8x128xf32, #tpu.memory_space<vmem>>, vector<8x128xf32>
    tpu.vector_store %arg3[%c0_8, %c0_9], %12 {strides = array<i32>} : memref<8x128xf32, #tpu.memory_space<vmem>>, vector<8x128xf32>,
    return
  }
}

</mosaic_0001>

<llo_original>
// kernel: tpu_custom_call.1
$region0: #{tpu_custom_call.1}
  #allocation0 [shape = 'u32[]', space=smem, size = 0x4, offset = 0x4, fixed_abs, tag = 'smem constant byte address 0x4 - core index']
  #allocation1 [shape = 'u32[144,128]{1,0:T(1,128)}', space=vmem, size = 0x12000, scoped, tag = 'internal scratch']
  %s0 = inlined_call_operand.hbm [shape: bf16[8,128], index: 0, kind: input, shape index: {}]
  %s1 = inlined_call_operand.hbm [shape: bf16[128,128], index: 1, kind: input, shape index: {}]
  %s2 = inlined_call_operand.hbm [shape: bf16[128,128], index: 2, kind: input, shape index: {}]
  %s3 = inlined_call_operand.hbm [shape: f32[8,128], index: 3, kind: output, shape index: {}]
  %s4 = sld [smem:[#allocation0]]
  $region34: #{tpu_custom_call.1} parent=0
    _
  %s6 = ssub.s32 1, %s4
  %s7 = scalar_select 0, %s6, %s4
  $region1: #{tpu_custom_call.1} parent=0
    #allocation2 [shape = 'u8[2048]{0}', space=vmem, size = 0x800, scoped, tag = 'input window, operand 0, single buffered']
    #allocation3 [shape = 's32[1]{0}', space=sflag, size = 0x4, scoped, tag = 'scoped memory for tpu_custom_call.1']
    #allocation4 [shape = 's32[1]{0}', space=sflag, size = 0x4, scoped, tag = 'scoped memory for tpu_custom_call.1']
    #allocation5 [shape = 'u8[32768]{0}', space=vmem, size = 0x8000, scoped, tag = 'input window, operand 1, single buffered']
    #allocation6 [shape = 's32[1]{0}', space=sflag, size = 0x4, scoped, tag = 'scoped memory for tpu_custom_call.1']
    #allocation7 [shape = 'u8[32768]{0}', space=vmem, size = 0x8000, scoped, tag = 'input window, operand 2, single buffered']
    #allocation8 [shape = 'u8[4096]{0}', space=vmem, size = 0x1000, scoped, tag = 'output window, operand 0, single buffered']
    %8 = vsyncpa [#allocation3], 0
    %9 = vsyncpa [#allocation6], 0
    %10 = vsyncpa [#allocation4], 0
    // Predicated region
    $region2: #{tpu_custom_call.1} parent=1 // pred_check
      _
    $region3: #{tpu_custom_call.1} parent=1 // pred_check_branch
      %12 = sbr.rel (0) target = $region5
    $region4: #{tpu_custom_call.1} parent=1 // pred_region
      %s14 = ssub.s32 64, 64
      %15 = vsyncadd [#allocation3], %s14
      %s17 = sshll.u32 [#allocation2], 4
      %s18 = int_to_ptr.vmem [resolvable:$true] %s17
      %20 = dma.hbm_to_vmem [thread:$0]  %s0, 64, %s18, [#allocation3]
    $region5: #{tpu_custom_call.1} parent=1 // pred_fallthru
      _
    // Predicated region
    $region6: #{tpu_custom_call.1} parent=1 // pred_check
      _
    $region7: #{tpu_custom_call.1} parent=1 // pred_check_branch
      %22 = sbr.rel (0) target = $region9
    $region8: #{tpu_custom_call.1} parent=1 // pred_region
      %s24 = ssub.s32 1024, 1024
      %25 = vsyncadd [#allocation6], %s24
      %s26 = sshll.u32 [#allocation5], 4
      %s27 = int_to_ptr.vmem [resolvable:$true] %s26
      %32 = dma.hbm_to_vmem [thread:$0]  %s1, 1024, %s27, [#allocation6], 64, 64, 4
    $region9: #{tpu_custom_call.1} parent=1 // pred_fallthru
      _
    // Predicated region
    $region10: #{tpu_custom_call.1} parent=1 // pred_check
      _
    $region11: #{tpu_custom_call.1} parent=1 // pred_check_branch
      %34 = sbr.rel (0) target = $region13
    $region12: #{tpu_custom_call.1} parent=1 // pred_region
      %s36 = ssub.s32 1024, 1024
      %37 = vsyncadd [#allocation6], %s36
      %s38 = sshll.u32 [#allocation7], 4
      %s39 = int_to_ptr.vmem [resolvable:$true] %s38
      %44 = dma.hbm_to_vmem [thread:$0]  %s2, 1024, %s39, [#allocation6], 64, 64, 4
    $region13: #{tpu_custom_call.1} parent=1 // pred_fallthru
      _
    // Predicated region
    $region14: #{tpu_custom_call.1} parent=1 // pred_check
      _
    $region15: #{tpu_custom_call.1} parent=1 // pred_check_branch
      %46 = sbr.rel (0) target = $region17
    $region16: #{tpu_custom_call.1} parent=1 // pred_region
      %47 = dma.done [#allocation3], 64
    $region17: #{tpu_custom_call.1} parent=1 // pred_fallthru
      _
    // Predicated region
    $region18: #{tpu_custom_call.1} parent=1 // pred_check
      _
    $region19: #{tpu_custom_call.1} parent=1 // pred_check_branch
      %49 = sbr.rel (0) target = $region21
    $region20: #{tpu_custom_call.1} parent=1 // pred_region
      %50 = dma.done [#allocation6], 1024
    $region21: #{tpu_custom_call.1} parent=1 // pred_fallthru
      _
    // Predicated region
    $region22: #{tpu_custom_call.1} parent=1 // pred_check
      _
    $region23: #{tpu_custom_call.1} parent=1 // pred_check_branch
      %52 = sbr.rel (0) target = $region25
    $region24: #{tpu_custom_call.1} parent=1 // pred_region
      %53 = dma.done [#allocation6], 1024
    $region25: #{tpu_custom_call.1} parent=1 // pred_fallthru
      _
    %v55 = vld [vmem:[#allocation2] sm:$0xf]
    %v56 = vld [vmem:[#allocation5] sm:$0xf]
    %v57 = vld [vmem:[#allocation5 + $0x4] sm:$0xf]
    %v58 = vld [vmem:[#allocation5 + $0x8] sm:$0xf]
    %v59 = vld [vmem:[#allocation5 + $0xc] sm:$0xf]
    %v60 = vld [vmem:[#allocation5 + $0x10] sm:$0xf]
    %v61 = vld [vmem:[#allocation5 + $0x14] sm:$0xf]
    %v62 = vld [vmem:[#allocation5 + $0x18] sm:$0xf]
    %v63 = vld [vmem:[#allocation5 + $0x1c] sm:$0xf]
    %v64 = vld [vmem:[#allocation5 + $0x20] sm:$0xf]
    %v65 = vld [vmem:[#allocation5 + $0x24] sm:$0xf]
    %v66 = vld [vmem:[#allocation5 + $0x28] sm:$0xf]
    %v67 = vld [vmem:[#allocation5 + $0x2c] sm:$0xf]
    %v68 = vld [vmem:[#allocation5 + $0x30] sm:$0xf]
    %v69 = vld [vmem:[#allocation5 + $0x34] sm:$0xf]
    %v70 = vld [vmem:[#allocation5 + $0x38] sm:$0xf]
    %v71 = vld [vmem:[#allocation5 + $0x3c] sm:$0xf]
    %v88 = vunpack.c.l.b16 %v56
    %v89 = vunpack.c.l.b16 %v57
    %v90 = vunpack.c.l.b16 %v58
    %v91 = vunpack.c.l.b16 %v59
    %v92 = vunpack.c.l.b16 %v60
    %v93 = vunpack.c.l.b16 %v61
    %v94 = vunpack.c.l.b16 %v62
    %v95 = vunpack.c.l.b16 %v63
    %v96 = vunpack.c.l.b16 %v64
    %v97 = vunpack.c.l.b16 %v65
    %v98 = vunpack.c.l.b16 %v66
    %v99 = vunpack.c.l.b16 %v67
    %v100 = vunpack.c.l.b16 %v68
    %v101 = vunpack.c.l.b16 %v69
    %v102 = vunpack.c.l.b16 %v70
    %v103 = vunpack.c.l.b16 %v71
    %v104 = vpack.c.b16 %v89, %v88
    %v105 = vpack.c.b16 %v91, %v90
    %v106 = vpack.c.b16 %v93, %v92
    %v107 = vpack.c.b16 %v95, %v94
    %v108 = vpack.c.b16 %v97, %v96
    %v109 = vpack.c.b16 %v99, %v98
    %v110 = vpack.c.b16 %v101, %v100
    %v111 = vpack.c.b16 %v103, %v102
    %120 = vmatprep.subr.bf16.mxu0 0
    %121 = vmatpush1.bf16.msra.mxu0 %v104
    %122 = vmatprep.subr.bf16.mxu0 0
    %123 = vmatpush1.bf16.msra.mxu0 %v105
    %124 = vmatprep.subr.bf16.mxu0 0
    %125 = vmatpush1.bf16.msra.mxu0 %v106
    %126 = vmatprep.subr.bf16.mxu0 0
    %127 = vmatpush1.bf16.msra.mxu0 %v107
    %128 = vmatprep.subr.bf16.mxu0 0
    %129 = vmatpush1.bf16.msra.mxu0 %v108
    %130 = vmatprep.subr.bf16.mxu0 0
    %131 = vmatpush1.bf16.msra.mxu0 %v109
    %132 = vmatprep.subr.bf16.mxu0 0
    %133 = vmatpush1.bf16.msra.mxu0 %v110
    %134 = vmatprep.subr.bf16.mxu0 0
    %135 = vmatpush1.bf16.msra.mxu0 %v111
    %136 = vmatprep.subr.bf16.mxu0 0
    %137 = vmatpush1.bf16.msra.mxu0 0
    %138 = vmatprep.subr.bf16.mxu0 0
    %139 = vmatpush1.bf16.msra.mxu0 0
    %140 = vmatprep.subr.bf16.mxu0 0
    %141 = vmatpush1.bf16.msra.mxu0 0
    %142 = vmatprep.subr.bf16.mxu0 0
    %143 = vmatpush1.bf16.msra.mxu0 0
    %144 = vmatprep.subr.bf16.mxu0 0
    %145 = vmatpush1.bf16.msra.mxu0 0
    %146 = vmatprep.subr.bf16.mxu0 0
    %147 = vmatpush1.bf16.msra.mxu0 0
    %148 = vmatprep.subr.bf16.mxu0 0
    %149 = vmatpush1.bf16.msra.mxu0 0
    %150 = vmatprep.subr.bf16.mxu0 0
    %151 = vmatpush1.bf16.msra.mxu0 0
    %152 = vmatprep.mubr.bf16.mxu0 0
    %153 = vmatmul.mubr.bf16.gmra.mrb[0].mxu0 %v55
    %v154 = vpop.f32.mrb[0].mxu0
    %v155 = vadd.f32 0.0, %v154
    %v156 = vpop.f32.mrb[0].mxu0
    %v157 = vpop.f32.mrb[0].mxu0
    %v158 = vpop.f32.mrb[0].mxu0
    %159 = vdwg.mxu0
    %v160 = vmax.f32 %v155, 0.0
    %v161 = vlaneseq
    %v162 = vand.u32 %v161, 127
    %vm163 = vcmp.eq.s32.totalorder %v162, 64
    %v164 = vsel %vm163, 1.0, %v160
    %v165 = vpack.c.bf16 %v164, %v164
    %v166 = vld [vmem:[#allocation7] sm:$0xf]
    %v167 = vld [vmem:[#allocation7 + $0x4] sm:$0xf]
    %v168 = vld [vmem:[#allocation7 + $0x8] sm:$0xf]
    %v169 = vld [vmem:[#allocation7 + $0xc] sm:$0xf]
    %v170 = vld [vmem:[#allocation7 + $0x10] sm:$0xf]
    %v171 = vld [vmem:[#allocation7 + $0x14] sm:$0xf]
    %v172 = vld [vmem:[#allocation7 + $0x18] sm:$0xf]
    %v173 = vld [vmem:[#allocation7 + $0x1c] sm:$0xf]
    %v174 = vld [vmem:[#allocation7 + $0x20] sm:$0xf]
    %v175 = vld [vmem:[#allocation7 + $0x24] sm:$0xf]
    %v176 = vld [vmem:[#allocation7 + $0x28] sm:$0xf]
    %v177 = vld [vmem:[#allocation7 + $0x2c] sm:$0xf]
    %v178 = vld [vmem:[#allocation7 + $0x30] sm:$0xf]
    %v179 = vld [vmem:[#allocation7 + $0x34] sm:$0xf]
    %v180 = vld [vmem:[#allocation7 + $0x38] sm:$0xf]
    %v181 = vld [vmem:[#allocation7 + $0x3c] sm:$0xf]
    %v198 = vunpack.c.l.b16 %v166
    %v199 = vunpack.c.l.b16 %v167
    %v200 = vunpack.c.l.b16 %v168
    %v201 = vunpack.c.l.b16 %v169
    %v202 = vunpack.c.l.b16 %v170
    %v203 = vunpack.c.l.b16 %v171
    %v204 = vunpack.c.l.b16 %v172
    %v205 = vunpack.c.l.b16 %v173
    %v206 = vunpack.c.l.b16 %v174
    %v207 = vunpack.c.l.b16 %v175
    %v208 = vunpack.c.l.b16 %v176
    %v209 = vunpack.c.l.b16 %v177
    %v210 = vunpack.c.l.b16 %v178
    %v211 = vunpack.c.l.b16 %v179
    %v212 = vunpack.c.l.b16 %v180
    %v213 = vunpack.c.l.b16 %v181
    %v214 = vpack.c.b16 %v199, %v198
    %v215 = vpack.c.b16 %v201, %v200
    %v216 = vpack.c.b16 %v203, %v202
    %v217 = vpack.c.b16 %v205, %v204
    %v218 = vpack.c.b16 %v207, %v206
    %v219 = vpack.c.b16 %v209, %v208
    %v220 = vpack.c.b16 %v211, %v210
    %v221 = vpack.c.b16 %v213, %v212
    %230 = vmatprep.subr.bf16.mxu0 0
    %231 = vmatpush1.bf16.msra.mxu0 %v214
    %232 = vmatprep.subr.bf16.mxu0 0
    %233 = vmatpush1.bf16.msra.mxu0 %v215
    %234 = vmatprep.subr.bf16.mxu0 0
    %235 = vmatpush1.bf16.msra.mxu0 %v216
    %236 = vmatprep.subr.bf16.mxu0 0
    %237 = vmatpush1.bf16.msra.mxu0 %v217
    %238 = vmatprep.subr.bf16.mxu0 0
    %239 = vmatpush1.bf16.msra.mxu0 %v218
    %240 = vmatprep.subr.bf16.mxu0 0
    %241 = vmatpush1.bf16.msra.mxu0 %v219
    %242 = vmatprep.subr.bf16.mxu0 0
    %243 = vmatpush1.bf16.msra.mxu0 %v220
    %244 = vmatprep.subr.bf16.mxu0 0
    %245 = vmatpush1.bf16.msra.mxu0 %v221
    %246 = vmatprep.subr.bf16.mxu0 0
    %247 = vmatpush1.bf16.msra.mxu0 0
    %248 = vmatprep.subr.bf16.mxu0 0
    %249 = vmatpush1.bf16.msra.mxu0 0
    %250 = vmatprep.subr.bf16.mxu0 0
    %251 = vmatpush1.bf16.msra.mxu0 0
    %252 = vmatprep.subr.bf16.mxu0 0
    %253 = vmatpush1.bf16.msra.mxu0 0
    %254 = vmatprep.subr.bf16.mxu0 0
    %255 = vmatpush1.bf16.msra.mxu0 0
    %256 = vmatprep.subr.bf16.mxu0 0
    %257 = vmatpush1.bf16.msra.mxu0 0
    %258 = vmatprep.subr.bf16.mxu0 0
    %259 = vmatpush1.bf16.msra.mxu0 0
    %260 = vmatprep.subr.bf16.mxu0 0
    %261 = vmatpush1.bf16.msra.mxu0 0
    %262 = vmatprep.mubr.bf16.mxu0 0
    %263 = vmatmul.mubr.bf16.gmra.mrb[0].mxu0 %v165
    %v264 = vpop.f32.mrb[0].mxu0
    %v265 = vadd.f32 0.0, %v264
    %v266 = vpop.f32.mrb[0].mxu0
    %v267 = vpop.f32.mrb[0].mxu0
    %v268 = vpop.f32.mrb[0].mxu0
    %269 = vdwg.mxu0
    %270 = vst [vmem:[#allocation8] sm:$0xff] %v265
    // Predicated region
    $region26: #{tpu_custom_call.1} parent=1 // pred_check
      _
    $region27: #{tpu_custom_call.1} parent=1 // pred_check_branch
      %272 = sbr.rel (0) target = $region29
    $region28: #{tpu_custom_call.1} parent=1 // pred_region
      %s274 = ssub.s32 128, 128
      %275 = vsyncadd [#allocation4], %s274
      %s277 = sshll.u32 [#allocation8], 4
      %s278 = int_to_ptr.vmem [resolvable:$true] %s277
      %280 = dma.vmem_to_hbm [thread:$0]  %s278, 128, %s3, [#allocation4]
    $region29: #{tpu_custom_call.1} parent=1 // pred_fallthru
      _
    // Predicated region
    $region30: #{tpu_custom_call.1} parent=1 // pred_check
      _
    $region31: #{tpu_custom_call.1} parent=1 // pred_check_branch
      %282 = sbr.rel (0) target = $region33
    $region32: #{tpu_custom_call.1} parent=1 // pred_region
      %283 = dma.done [#allocation4], 128
    $region33: #{tpu_custom_call.1} parent=1 // pred_fallthru
      _
    %284 = vsyncpa [#allocation3], 1
    %285 = vsyncpa [#allocation6], 1
    %286 = vsyncpa [#allocation4], 1

</llo_original>
